<compile_context>
chip_gen: v6e
topology: v6e:2x2x1
jax: 0.10.0
libtpu: 0.0.40
codegen_flags: <defaults>
</compile_context>

<pallas_src>
import jax
import jax.numpy as jnp
from jax.experimental import pallas as pl
from jax.experimental.pallas import tpu as pltpu


def _round_up(x, m):
    return ((x + m - 1) // m) * m


def _incentive_kernel(x_ref, a_ref,
                      w0_ref, b0_ref,
                      w1a_ref, w1b_ref, b1_ref,
                      w2_ref, b2_ref,
                      out_ref):
    # fc_reward: Linear + ReLU
    h1 = jnp.dot(x_ref[...], w0_ref[...],
                 preferred_element_type=jnp.float32) + b0_ref[...]
    h1 = jnp.maximum(h1, 0.0)

    # fc1_reward: Linear(cat([h1, actions])) + ReLU
    #   cat([h1, a]) @ W1 == h1 @ W1a + a @ W1b   (W1 split row-wise)
    h2 = (jnp.dot(h1, w1a_ref[...], preferred_element_type=jnp.float32)
          + jnp.dot(a_ref[...], w1b_ref[...], preferred_element_type=jnp.float32)
          + b1_ref[...])
    h2 = jnp.maximum(h2, 0.0)

    # fc2_reward + sigmoid, stored at native (narrow) width.
    out = jnp.dot(h2, w2_ref[...], preferred_element_type=jnp.float32) + b2_ref[...]
    out_ref[...] = jax.nn.sigmoid(out).astype(out_ref.dtype)


def incentive_forward(inputs, actions, params, *, tile_b=None):
    """inputs: [B, input_shape], actions: [B, other_action_shape] -> [B, num_agents]."""
    w0, b0, w1, b1, w2, b2 = (params[k] for k in ("w0", "b0", "w1", "b1", "w2", "b2"))
    B, in_dim = inputs.shape
    act_dim = actions.shape[-1]
    h1 = w0.shape[1]
    n_agents = w2.shape[1]

    # ---- batch tile sizing (no batch padding; ragged last block is masked) ----
    if tile_b is None:
        if B <= 64:
            tile_b = _round_up(max(B, 8), 8)        # single block, minimal overhead
        elif B <= 4096:
            tile_b = _round_up(pl.cdiv(B, 2), 8)    # 2 balanced blocks (v7x: 2 TCs)
        else:
            tile_b = 2048                           # streaming tile for large batches
    grid = (pl.cdiv(B, tile_b),)

    # Split W1 rows: part applied to h1, part applied to actions (no padding).
    w1a = w1[:h1, :]
    w1b = w1[h1:, :]

    def batch_spec(feat):
        return pl.BlockSpec((tile_b, feat), lambda i: (i, 0))

    def full_spec(shape):
        return pl.BlockSpec(shape, lambda i: (0,) * len(shape))

    out = pl.pallas_call(
        _incentive_kernel,
        out_shape=jax.ShapeDtypeStruct((B, n_agents), jnp.float32),
        grid_spec=pl.GridSpec(
            grid=grid,
            in_specs=[
                batch_spec(in_dim),            # inputs
                batch_spec(act_dim),           # actions (native width)
                full_spec(w0.shape),           # W0
                full_spec(b0.shape),           # b0 (1, h1)
                full_spec(w1a.shape),          # W1a
                full_spec(w1b.shape),          # W1b (act_dim, h2)
                full_spec(b1.shape),           # b1 (1, h2)
                full_spec(w2.shape),           # W2 (h2, n_agents)
                full_spec(b2.shape),           # b2 (1, n_agents)
            ],
            out_specs=batch_spec(n_agents),
        ),
        compiler_params=pltpu.CompilerParams(
            dimension_semantics=("parallel",),
            vmem_limit_bytes=32 * 1024 * 1024),
    )(inputs, actions, w0, b0, w1a, w1b, b1, w2, b2)

    return out


def init_params(key, input_shape, inc_h1, inc_h2, other_action_shape, num_agents):
    """Deterministic init mimicking nn.Linear default (uniform +/- 1/sqrt(fan_in))."""
    ks = jax.random.split(key, 6)

    def lin(kw, kb, fan_in, fan_out):
        bound = 1.0 / jnp.sqrt(fan_in)
        w = jax.random.uniform(kw, (fan_in, fan_out), jnp.float32, -bound, bound)
        b = jax.random.uniform(kb, (1, fan_out), jnp.float32, -bound, bound)
        return w, b

    w0, b0 = lin(ks[0], ks[1], input_shape, inc_h1)
    w1, b1 = lin(ks[2], ks[3], inc_h1 + other_action_shape, inc_h2)
    w2, b2 = lin(ks[4], ks[5], inc_h2, num_agents)
    return dict(w0=w0, b0=b0, w1=w1, b1=b1, w2=w2, b2=b2)


def reference_forward(inputs, actions, params):
    h1 = jnp.maximum(inputs @ params["w0"] + params["b0"], 0.0)
    cat = jnp.concatenate([h1, actions], axis=-1)
    h2 = jnp.maximum(cat @ params["w1"] + params["b1"], 0.0)
    out = h2 @ params["w2"] + params["b2"]
    return jax.nn.sigmoid(out)


if __name__ == "__main__":
    # Module hyperparameters (small, consistent with the PyTorch __init__):
    num_agents = 4
    n_actions = 5
    other_action_1hot = True
    input_shape = 32
    inc_h1 = 32
    inc_h2 = 32
    other_action_shape = (num_agents - 1) * n_actions if other_action_1hot else num_agents - 1

    key = jax.random.PRNGKey(0)
    k_in, k_act, k_params = jax.random.split(key, 3)
    params = init_params(k_params, input_shape, inc_h1, inc_h2,
                         other_action_shape, num_agents)

    def check(B):
        ki, ka = jax.random.split(jax.random.fold_in(key, B))
        inputs = jax.random.normal(ki, (B, input_shape), jnp.float32)
        actions = jax.random.normal(ka, (B, other_action_shape), jnp.float32)
        out = jax.block_until_ready(incentive_forward(inputs, actions, params))
        ref = reference_forward(inputs, actions, params)
        assert out.shape == (B, num_agents)
        assert jnp.allclose(out, ref, atol=1e-5, rtol=1e-5), f"mismatch vs reference (B={B})"

    check(16)      # small batch: single block
    check(1030)    # mid batch: 2 blocks, ragged last block (boundary masking)
    check(4100)    # large batch: 2048-row tiles, ragged last block

    print("KERNEL_OK")
</pallas_src>

<mosaic_0001>
module attributes {stable_mosaic.version = 11 : i64} {
  func.func @_incentive_kernel(%arg0: i32, %arg1: memref<16x32xf32, #tpu.memory_space<vmem>>, %arg2: memref<16x15xf32, #tpu.memory_space<vmem>>, %arg3: memref<32x32xf32, #tpu.memory_space<vmem>>, %arg4: memref<1x32xf32, #tpu.memory_space<vmem>>, %arg5: memref<32x32xf32, #tpu.memory_space<vmem>>, %arg6: memref<15x32xf32, #tpu.memory_space<vmem>>, %arg7: memref<1x32xf32, #tpu.memory_space<vmem>>, %arg8: memref<32x4xf32, #tpu.memory_space<vmem>>, %arg9: memref<1x4xf32, #tpu.memory_space<vmem>>, %arg10: memref<16x4xf32, #tpu.memory_space<vmem>>) attributes {dimension_semantics = [#tpu.dimension_semantics<parallel>], iteration_bounds = array<i64: 1>, scalar_prefetch = 0 : i64, scratch_operands = 0 : i64, tpu.core_type = #tpu.core_type<tc>, window_params = [{transform_indices = @transform_0, window_bounds = array<i64: 16, 32>}, {transform_indices = @transform_1, window_bounds = array<i64: 16, 15>}, {pipeline_mode = #tpu.pipeline_mode<synchronous>, transform_indices = @transform_2, window_bounds = array<i64: 32, 32>}, {pipeline_mode = #tpu.pipeline_mode<synchronous>, transform_indices = @transform_3, window_bounds = array<i64: 1, 32>}, {pipeline_mode = #tpu.pipeline_mode<synchronous>, transform_indices = @transform_4, window_bounds = array<i64: 32, 32>}, {pipeline_mode = #tpu.pipeline_mode<synchronous>, transform_indices = @transform_5, window_bounds = array<i64: 15, 32>}, {pipeline_mode = #tpu.pipeline_mode<synchronous>, transform_indices = @transform_6, window_bounds = array<i64: 1, 32>}, {pipeline_mode = #tpu.pipeline_mode<synchronous>, transform_indices = @transform_7, window_bounds = array<i64: 32, 4>}, {pipeline_mode = #tpu.pipeline_mode<synchronous>, transform_indices = @transform_8, window_bounds = array<i64: 1, 4>}, {transform_indices = @transform_9, window_bounds = array<i64: 16, 4>}]} {
    %c0 = arith.constant 0 : index
    %c0_0 = arith.constant 0 : index
    %0 = vector.load %arg1[%c0, %c0_0] : memref<16x32xf32, #tpu.memory_space<vmem>>, vector<16x32xf32>
    %c0_1 = arith.constant 0 : index
    %c0_2 = arith.constant 0 : index
    %1 = vector.load %arg3[%c0_1, %c0_2] : memref<32x32xf32, #tpu.memory_space<vmem>>, vector<32x32xf32>
    %cst = arith.constant dense<0.000000e+00> : vector<16x32xf32>
    %2 = tpu.matmul %0, %1, %cst {dimension_numbers = #tpu.dot_dimension_numbers<[1], [0], [0], [1], [0, 0, 1, 1], [], []>} : vector<16x32xf32>, vector<32x32xf32>, vector<16x32xf32> -> vector<16x32xf32>
    %c0_3 = arith.constant 0 : index
    %c0_4 = arith.constant 0 : index
    %3 = vector.load %arg4[%c0_3, %c0_4] : memref<1x32xf32, #tpu.memory_space<vmem>>, vector<1x32xf32>
    %4 = vector.broadcast %3 : vector<1x32xf32> to vector<16x32xf32>
    %5 = arith.addf %2, %4 : vector<16x32xf32>
    %cst_5 = arith.constant 0.000000e+00 : f32
    %6 = vector.broadcast %cst_5 : f32 to vector<16x32xf32>
    %7 = arith.maximumf %5, %6 : vector<16x32xf32>
    %c0_6 = arith.constant 0 : index
    %c0_7 = arith.constant 0 : index
    %8 = vector.load %arg5[%c0_6, %c0_7] : memref<32x32xf32, #tpu.memory_space<vmem>>, vector<32x32xf32>
    %cst_8 = arith.constant dense<0.000000e+00> : vector<16x32xf32>
    %9 = tpu.matmul %7, %8, %cst_8 {dimension_numbers = #tpu.dot_dimension_numbers<[1], [0], [0], [1], [0, 0, 1, 1], [], []>} : vector<16x32xf32>, vector<32x32xf32>, vector<16x32xf32> -> vector<16x32xf32>
    %c0_9 = arith.constant 0 : index
    %c0_10 = arith.constant 0 : index
    %10 = vector.load %arg2[%c0_9, %c0_10] : memref<16x15xf32, #tpu.memory_space<vmem>>, vector<16x15xf32>
    %c0_11 = arith.constant 0 : index
    %c0_12 = arith.constant 0 : index
    %11 = vector.load %arg6[%c0_11, %c0_12] : memref<15x32xf32, #tpu.memory_space<vmem>>, vector<15x32xf32>
    %cst_13 = arith.constant dense<0.000000e+00> : vector<16x32xf32>
    %12 = tpu.matmul %10, %11, %cst_13 {dimension_numbers = #tpu.dot_dimension_numbers<[1], [0], [0], [1], [0, 0, 1, 1], [], []>} : vector<16x15xf32>, vector<15x32xf32>, vector<16x32xf32> -> vector<16x32xf32>
    %13 = arith.addf %9, %12 : vector<16x32xf32>
    %c0_14 = arith.constant 0 : index
    %c0_15 = arith.constant 0 : index
    %14 = vector.load %arg7[%c0_14, %c0_15] : memref<1x32xf32, #tpu.memory_space<vmem>>, vector<1x32xf32>
    %15 = vector.broadcast %14 : vector<1x32xf32> to vector<16x32xf32>
    %16 = arith.addf %13, %15 : vector<16x32xf32>
    %cst_16 = arith.constant 0.000000e+00 : f32
    %17 = vector.broadcast %cst_16 : f32 to vector<16x32xf32>
    %18 = arith.maximumf %16, %17 : vector<16x32xf32>
    %c0_17 = arith.constant 0 : index
    %c0_18 = arith.constant 0 : index
    %19 = vector.load %arg8[%c0_17, %c0_18] : memref<32x4xf32, #tpu.memory_space<vmem>>, vector<32x4xf32>
    %cst_19 = arith.constant dense<0.000000e+00> : vector<16x4xf32>
    %20 = tpu.matmul %18, %19, %cst_19 {dimension_numbers = #tpu.dot_dimension_numbers<[1], [0], [0], [1], [0, 0, 1, 1], [], []>} : vector<16x32xf32>, vector<32x4xf32>, vector<16x4xf32> -> vector<16x4xf32>
    %c0_20 = arith.constant 0 : index
    %c0_21 = arith.constant 0 : index
    %21 = vector.load %arg9[%c0_20, %c0_21] : memref<1x4xf32, #tpu.memory_space<vmem>>, vector<1x4xf32>
    %22 = vector.broadcast %21 : vector<1x4xf32> to vector<16x4xf32>
    %23 = arith.addf %20, %22 : vector<16x4xf32>
    %24 = arith.negf %23 : vector<16x4xf32>
    %25 = math.exp %24 : vector<16x4xf32>
    %cst_22 = arith.constant 1.000000e+00 : f32
    %26 = vector.broadcast %cst_22 : f32 to vector<16x4xf32>
    %27 = arith.addf %26, %25 : vector<16x4xf32>
    %28 = arith.divf %26, %27 : vector<16x4xf32>
    %c0_23 = arith.constant 0 : index
    %c0_24 = arith.constant 0 : index
    %29 = vector.load %arg10[%c0_23, %c0_24] : memref<16x4xf32, #tpu.memory_space<vmem>>, vector<16x4xf32>
    tpu.vector_store %arg10[%c0_23, %c0_24], %28 {strides = array<i32>} : memref<16x4xf32, #tpu.memory_space<vmem>>, vector<16x4xf32>,
    return
  }
  func.func @transform_0(%arg0: i32) -> (i32, i32) {
    %c0_i32 = arith.constant 0 : i32
    %c0_i32_0 = arith.constant 0 : i32
    return %arg0, %c0_i32 : i32, i32
  }
  func.func @transform_1(%arg0: i32) -> (i32, i32) {
    %c0_i32 = arith.constant 0 : i32
    %c0_i32_0 = arith.constant 0 : i32
    return %arg0, %c0_i32 : i32, i32
  }
  func.func @transform_2(%arg0: i32) -> (i32, i32) {
    %c0_i32 = arith.constant 0 : i32
    %c0_i32_0 = arith.constant 0 : i32
    %c0_i32_1 = arith.constant 0 : i32
    return %c0_i32, %c0_i32_0 : i32, i32
  }
  func.func @transform_3(%arg0: i32) -> (i32, i32) {
    %c0_i32 = arith.constant 0 : i32
    %c0_i32_0 = arith.constant 0 : i32
    %c0_i32_1 = arith.constant 0 : i32
    return %c0_i32, %c0_i32_0 : i32, i32
  }
  func.func @transform_4(%arg0: i32) -> (i32, i32) {
    %c0_i32 = arith.constant 0 : i32
    %c0_i32_0 = arith.constant 0 : i32
    %c0_i32_1 = arith.constant 0 : i32
    return %c0_i32, %c0_i32_0 : i32, i32
  }
  func.func @transform_5(%arg0: i32) -> (i32, i32) {
    %c0_i32 = arith.constant 0 : i32
    %c0_i32_0 = arith.constant 0 : i32
    %c0_i32_1 = arith.constant 0 : i32
    return %c0_i32, %c0_i32_0 : i32, i32
  }
  func.func @transform_6(%arg0: i32) -> (i32, i32) {
    %c0_i32 = arith.constant 0 : i32
    %c0_i32_0 = arith.constant 0 : i32
    %c0_i32_1 = arith.constant 0 : i32
    return %c0_i32, %c0_i32_0 : i32, i32
  }
  func.func @transform_7(%arg0: i32) -> (i32, i32) {
    %c0_i32 = arith.constant 0 : i32
    %c0_i32_0 = arith.constant 0 : i32
    %c0_i32_1 = arith.constant 0 : i32
    return %c0_i32, %c0_i32_0 : i32, i32
  }
  func.func @transform_8(%arg0: i32) -> (i32, i32) {
    %c0_i32 = arith.constant 0 : i32
    %c0_i32_0 = arith.constant 0 : i32
    %c0_i32_1 = arith.constant 0 : i32
    return %c0_i32, %c0_i32_0 : i32, i32
  }
  func.func @transform_9(%arg0: i32) -> (i32, i32) {
    %c0_i32 = arith.constant 0 : i32
    %c0_i32_0 = arith.constant 0 : i32
    return %arg0, %c0_i32 : i32, i32
  }
}

</mosaic_0001>

<llo_original>
// kernel: tpu_custom_call.1
$region0: #{tpu_custom_call.1}
  #allocation0 [shape = 'u32[]', space=smem, size = 0x4, offset = 0x4, fixed_abs, tag = 'smem constant byte address 0x4 - core index']
  #allocation1 [shape = 'u32[144,128]{1,0:T(1,128)}', space=vmem, size = 0x12000, scoped, tag = 'internal scratch']
  %s0 = inlined_call_operand.hbm [shape: f32[16,32], index: 0, kind: input, shape index: {}]
  %s1 = inlined_call_operand.hbm [shape: f32[16,15], index: 1, kind: input, shape index: {}]
  %s2 = inlined_call_operand.vmem [shape: f32[32,32], index: 2, kind: input, shape index: {}]
  %s3 = inlined_call_operand.vmem [shape: f32[1,32], index: 3, kind: input, shape index: {}]
  %s4 = inlined_call_operand.hbm [shape: f32[32,32], index: 4, kind: input, shape index: {}]
  %s5 = inlined_call_operand.hbm [shape: f32[15,32], index: 5, kind: input, shape index: {}]
  %s6 = inlined_call_operand.vmem [shape: f32[1,32], index: 6, kind: input, shape index: {}]
  %s7 = inlined_call_operand.vmem [shape: f32[32,4], index: 7, kind: input, shape index: {}]
  %s8 = inlined_call_operand.vmem [shape: f32[1,4], index: 8, kind: input, shape index: {}]
  %s9 = inlined_call_operand.vmem [shape: f32[16,4], index: 9, kind: output, shape index: {}]
  %s10 = sld [smem:[#allocation0]]
  $region62: #{tpu_custom_call.1} parent=0
    _
  %s12 = ssub.s32 1, %s10
  %s13 = scalar_select 0, %s12, %s10
  $region1: #{tpu_custom_call.1} parent=0
    #allocation2 [shape = 'u8[8192]{0}', space=vmem, size = 0x2000, scoped, tag = 'input window, operand 0, single buffered']
    #allocation3 [shape = 's32[1]{0}', space=sflag, size = 0x4, scoped, tag = 'scoped memory for tpu_custom_call.1']
    #allocation4 [shape = 'u8[8192]{0}', space=vmem, size = 0x2000, scoped, tag = 'input window, operand 1, single buffered']
    #allocation5 [shape = 's32[1]{0}', space=sflag, size = 0x4, scoped, tag = 'scoped memory for tpu_custom_call.1']
    #allocation6 [shape = 'u8[16384]{0}', space=vmem, size = 0x4000, scoped, tag = 'input window, operand 4, single buffered']
    #allocation7 [shape = 'u8[8192]{0}', space=vmem, size = 0x2000, scoped, tag = 'input window, operand 5, single buffered']
    #allocation8 [shape = 's32[1]{0}', space=sflag, size = 0x4, scoped, tag = 'scoped memory for tpu_custom_call.1']
    %14 = vsyncpa [#allocation3], 0
    %15 = vsyncpa [#allocation5], 0
    %16 = vsyncpa [#allocation8], 0
    // Predicated region
    $region2: #{tpu_custom_call.1} parent=1 // pred_check
      _
    $region3: #{tpu_custom_call.1} parent=1 // pred_check_branch
      %18 = sbr.rel (0) target = $region5
    $region4: #{tpu_custom_call.1} parent=1 // pred_region
      %s20 = ssub.s32 256, 256
      %21 = vsyncadd [#allocation3], %s20
      %s22 = sshll.u32 [#allocation2], 4
      %s23 = int_to_ptr.vmem [resolvable:$true] %s22
      %28 = dma.hbm_to_vmem [thread:$0]  %s0, 256, %s23, [#allocation3], 128, 128, 8
    $region5: #{tpu_custom_call.1} parent=1 // pred_fallthru
      _
    // Predicated region
    $region6: #{tpu_custom_call.1} parent=1 // pred_check
      _
    $region7: #{tpu_custom_call.1} parent=1 // pred_check_branch
      %30 = sbr.rel (0) target = $region9
    $region8: #{tpu_custom_call.1} parent=1 // pred_region
      %s32 = ssub.s32 256, 256
      %33 = vsyncadd [#allocation5], %s32
      %s34 = sshll.u32 [#allocation4], 4
      %s35 = int_to_ptr.vmem [resolvable:$true] %s34
      %40 = dma.hbm_to_vmem [thread:$0]  %s1, 256, %s35, [#allocation5], 128, 128, 8
    $region9: #{tpu_custom_call.1} parent=1 // pred_fallthru
      _
    // Predicated region
    $region10: #{tpu_custom_call.1} parent=1 // pred_check
      _
    $region11: #{tpu_custom_call.1} parent=1 // pred_check_branch
      %42 = sbr.rel (0) target = $region13
    $region12: #{tpu_custom_call.1} parent=1 // pred_region
      _
    $region13: #{tpu_custom_call.1} parent=1 // pred_fallthru
      _
    // Predicated region
    $region14: #{tpu_custom_call.1} parent=1 // pred_check
      _
    $region15: #{tpu_custom_call.1} parent=1 // pred_check_branch
      %44 = sbr.rel (0) target = $region17
    $region16: #{tpu_custom_call.1} parent=1 // pred_region
      _
    $region17: #{tpu_custom_call.1} parent=1 // pred_fallthru
      _
    // Predicated region
    $region18: #{tpu_custom_call.1} parent=1 // pred_check
      _
    $region19: #{tpu_custom_call.1} parent=1 // pred_check_branch
      %46 = sbr.rel (0) target = $region21
    $region20: #{tpu_custom_call.1} parent=1 // pred_region
      %s48 = ssub.s32 512, 512
      %49 = vsyncadd [#allocation5], %s48
      %s50 = sshll.u32 [#allocation6], 4
      %s51 = int_to_ptr.vmem [resolvable:$true] %s50
      %56 = dma.hbm_to_vmem [thread:$0]  %s4, 512, %s51, [#allocation5], 128, 128, 8
    $region21: #{tpu_custom_call.1} parent=1 // pred_fallthru
      _
    // Predicated region
    $region22: #{tpu_custom_call.1} parent=1 // pred_check
      _
    $region23: #{tpu_custom_call.1} parent=1 // pred_check_branch
      %58 = sbr.rel (0) target = $region25
    $region24: #{tpu_custom_call.1} parent=1 // pred_region
      %s60 = ssub.s32 256, 256
      %61 = vsyncadd [#allocation8], %s60
      %s62 = sshll.u32 [#allocation7], 4
      %s63 = int_to_ptr.vmem [resolvable:$true] %s62
      %68 = dma.hbm_to_vmem [thread:$0]  %s5, 256, %s63, [#allocation8], 128, 128, 8
    $region25: #{tpu_custom_call.1} parent=1 // pred_fallthru
      _
    // Predicated region
    $region26: #{tpu_custom_call.1} parent=1 // pred_check
      _
    $region27: #{tpu_custom_call.1} parent=1 // pred_check_branch
      %70 = sbr.rel (0) target = $region29
    $region28: #{tpu_custom_call.1} parent=1 // pred_region
      _
    $region29: #{tpu_custom_call.1} parent=1 // pred_fallthru
      _
    // Predicated region
    $region30: #{tpu_custom_call.1} parent=1 // pred_check
      _
    $region31: #{tpu_custom_call.1} parent=1 // pred_check_branch
      %72 = sbr.rel (0) target = $region33
    $region32: #{tpu_custom_call.1} parent=1 // pred_region
      _
    $region33: #{tpu_custom_call.1} parent=1 // pred_fallthru
      _
    // Predicated region
    $region34: #{tpu_custom_call.1} parent=1 // pred_check
      _
    $region35: #{tpu_custom_call.1} parent=1 // pred_check_branch
      %74 = sbr.rel (0) target = $region37
    $region36: #{tpu_custom_call.1} parent=1 // pred_region
      _
    $region37: #{tpu_custom_call.1} parent=1 // pred_fallthru
      _
    // Predicated region
    $region38: #{tpu_custom_call.1} parent=1 // pred_check
      _
    $region39: #{tpu_custom_call.1} parent=1 // pred_check_branch
      %76 = sbr.rel (0) target = $region41
    $region40: #{tpu_custom_call.1} parent=1 // pred_region
      %77 = dma.done [#allocation3], 256
    $region41: #{tpu_custom_call.1} parent=1 // pred_fallthru
      _
    // Predicated region
    $region42: #{tpu_custom_call.1} parent=1 // pred_check
      _
    $region43: #{tpu_custom_call.1} parent=1 // pred_check_branch
      %79 = sbr.rel (0) target = $region45
    $region44: #{tpu_custom_call.1} parent=1 // pred_region
      %80 = dma.done [#allocation5], 256
    $region45: #{tpu_custom_call.1} parent=1 // pred_fallthru
      _
    // Predicated region
    $region46: #{tpu_custom_call.1} parent=1 // pred_check
      _
    $region47: #{tpu_custom_call.1} parent=1 // pred_check_branch
      %82 = sbr.rel (0) target = $region49
    $region48: #{tpu_custom_call.1} parent=1 // pred_region
      %83 = dma.done [#allocation5], 512
    $region49: #{tpu_custom_call.1} parent=1 // pred_fallthru
      _
    // Predicated region
    $region50: #{tpu_custom_call.1} parent=1 // pred_check
      _
    $region51: #{tpu_custom_call.1} parent=1 // pred_check_branch
      %85 = sbr.rel (0) target = $region53
    $region52: #{tpu_custom_call.1} parent=1 // pred_region
      %86 = dma.done [#allocation8], 256
    $region53: #{tpu_custom_call.1} parent=1 // pred_fallthru
      _
    %v87 = vld [vmem:[#allocation2] sm:$0xff]
    %v88 = vld [vmem:[#allocation2 + $0x8] sm:$0xff]
    %v89 = vld [vmem:[%s2] sm:$0xff]
    %v90 = vld [vmem:[%s2 + $0x8] sm:$0xff]
    %v91 = vld [vmem:[%s2 + $0x10] sm:$0xff]
    %v92 = vld [vmem:[%s2 + $0x18] sm:$0xff]
    %v93 = vld [vmem:[%s3] sm:$0x1]
    %v95 = vlaneseq
    %v96 = vshrl.u32 %v95, 7
    %v97 = vsub.s32 0, %v96
    %v98 = vrot.slane %v93, %v97
    %vm100 = vcmask 261120
    %v102 = vsel %vm100, %v87, 0
    %v105 = vsel %vm100, %v88, 0
    %107 = vmatprep.subr.mxu0 0.0
    %108 = vmatpush1.msra.mxu0 0.0
    %109 = vmatprep.subr.mxu0 0.0
    %110 = vmatpush1.msra.mxu0 0.0
    %111 = vmatprep.subr.mxu0 0.0
    %112 = vmatpush1.msra.mxu0 0.0
    %113 = vmatprep.subr.mxu0 0.0
    %114 = vmatpush1.msra.mxu0 0.0
    %115 = vmatprep.subr.mxu0 0.0
    %116 = vmatpush1.msra.mxu0 0.0
    %117 = vmatprep.subr.mxu0 0.0
    %118 = vmatpush1.msra.mxu0 0.0
    %119 = vmatprep.subr.mxu0 0.0
    %120 = vmatpush1.msra.mxu0 0.0
    %121 = vmatprep.subr.mxu0 0.0
    %122 = vmatpush1.msra.mxu0 0.0
    %123 = vmatprep.subr.mxu0 0.0
    %124 = vmatpush1.msra.mxu0 0.0
    %125 = vmatprep.subr.mxu0 0.0
    %126 = vmatpush1.msra.mxu0 0.0
    %127 = vmatprep.subr.mxu0 0.0
    %128 = vmatpush1.msra.mxu0 0.0
    %129 = vmatprep.subr.mxu0 0.0
    %130 = vmatpush1.msra.mxu0 0.0
    %131 = vmatprep.subr.mxu0 0.0
    %132 = vmatpush1.msra.mxu0 %v92
    %133 = vmatprep.subr.mxu0 0.0
    %134 = vmatpush1.msra.mxu0 %v91
    %135 = vmatprep.subr.mxu0 0.0
    %136 = vmatpush1.msra.mxu0 %v90
    %137 = vmatprep.subr.mxu0 0.0
    %138 = vmatpush1.msra.mxu0 %v89
    %139 = vmatprep.subr.mxu0 0.0
    %140 = vmatpush2.msra.mxu0 0.0
    %141 = vmatprep.subr.mxu0 0.0
    %142 = vmatpush2.msra.mxu0 0.0
    %143 = vmatprep.subr.mxu0 0.0
    %144 = vmatpush2.msra.mxu0 0.0
    %145 = vmatprep.subr.mxu0 0.0
    %146 = vmatpush2.msra.mxu0 0.0
    %147 = vmatprep.subr.mxu0 0.0
    %148 = vmatpush2.msra.mxu0 0.0
    %149 = vmatprep.subr.mxu0 0.0
    %150 = vmatpush2.msra.mxu0 0.0
    %151 = vmatprep.subr.mxu0 0.0
    %152 = vmatpush2.msra.mxu0 0.0
    %153 = vmatprep.subr.mxu0 0.0
    %154 = vmatpush2.msra.mxu0 0.0
    %155 = vmatprep.subr.mxu0 0.0
    %156 = vmatpush2.msra.mxu0 0.0
    %157 = vmatprep.subr.mxu0 0.0
    %158 = vmatpush2.msra.mxu0 0.0
    %159 = vmatprep.subr.mxu0 0.0
    %160 = vmatpush2.msra.mxu0 0.0
    %161 = vmatprep.subr.mxu0 0.0
    %162 = vmatpush2.msra.mxu0 0.0
    %163 = vmatprep.subr.mxu0 0.0
    %164 = vmatpush2.msra.mxu0 0.0
    %165 = vmatprep.subr.mxu0 0.0
    %166 = vmatpush2.msra.mxu0 0.0
    %167 = vmatprep.subr.mxu0 0.0
    %168 = vmatpush2.msra.mxu0 0.0
    %169 = vmatprep.subr.mxu0 0.0
    %170 = vmatpush2.msra.mxu0 0.0
    %171 = vmatprep.mubr.f32.mxu0 0.0
    %172 = vmatmul.mubr.f32.gmra.mxu0 %v102
    %v173 = vpop.f32.mrf.mxu0
    %v174 = vadd.f32 %v98, %v173
    %v175 = vpop.f32.mrf.mxu0
    %176 = vmatprep.mubr.f32.mxu0 0.0
    %177 = vmatmul.mubr.f32.gmra.mxu0 %v105
    %v178 = vpop.f32.mrf.mxu0
    %v179 = vadd.f32 %v98, %v178
    %v180 = vpop.f32.mrf.mxu0
    %181 = vdwg.mxu0
    %v182 = vmax.f32 %v174, 0.0
    %v183 = vmax.f32 %v179, 0.0
    %v184 = vld [vmem:[#allocation6] sm:$0xff]
    %v185 = vld [vmem:[#allocation6 + $0x8] sm:$0xff]
    %v186 = vld [vmem:[#allocation6 + $0x10] sm:$0xff]
    %v187 = vld [vmem:[#allocation6 + $0x18] sm:$0xff]
    %v188 = vld [vmem:[#allocation4] sm:$0xff]
    %v189 = vld [vmem:[#allocation4 + $0x8] sm:$0xff]
    %v190 = vld [vmem:[#allocation7] sm:$0xff]
    %v191 = vld [vmem:[#allocation7 + $0x8] sm:$0x7f]
    %vm192 = vcmask 121856
    %v194 = vsel %vm192, %v188, 0
    %v197 = vsel %vm192, %v189, 0
    %vm199 = vcmask 1046528
    %v201 = vsel %vm199, %v191, 0
    %203 = vmatprep.subr.mxu0 0.0
    %204 = vmatpush1.msra.mxu0 0.0
    %205 = vmatprep.subr.mxu0 0.0
    %206 = vmatpush1.msra.mxu0 0.0
    %207 = vmatprep.subr.mxu0 0.0
    %208 = vmatpush1.msra.mxu0 0.0
    %209 = vmatprep.subr.mxu0 0.0
    %210 = vmatpush1.msra.mxu0 0.0
    %211 = vmatprep.subr.mxu0 0.0
    %212 = vmatpush1.msra.mxu0 0.0
    %213 = vmatprep.subr.mxu0 0.0
    %214 = vmatpush1.msra.mxu0 0.0
    %215 = vmatprep.subr.mxu0 0.0
    %216 = vmatpush1.msra.mxu0 0.0
    %217 = vmatprep.subr.mxu0 0.0
    %218 = vmatpush1.msra.mxu0 0.0
    %219 = vmatprep.subr.mxu0 0.0
    %220 = vmatpush1.msra.mxu0 0.0
    %221 = vmatprep.subr.mxu0 0.0
    %222 = vmatpush1.msra.mxu0 0.0
    %223 = vmatprep.subr.mxu0 0.0
    %224 = vmatpush1.msra.mxu0 0.0
    %225 = vmatprep.subr.mxu0 0.0
    %226 = vmatpush1.msra.mxu0 0.0
    %227 = vmatprep.subr.mxu0 0.0
    %228 = vmatpush1.msra.mxu0 0.0
    %229 = vmatprep.subr.mxu0 0.0
    %230 = vmatpush1.msra.mxu0 0.0
    %231 = vmatprep.subr.mxu0 0.0
    %232 = vmatpush1.msra.mxu0 %v201
    %233 = vmatprep.subr.mxu0 0.0
    %234 = vmatpush1.msra.mxu0 %v190
    %235 = vmatprep.subr.mxu0 0.0
    %236 = vmatpush2.msra.mxu0 0.0
    %237 = vmatprep.subr.mxu0 0.0
    %238 = vmatpush2.msra.mxu0 0.0
    %239 = vmatprep.subr.mxu0 0.0
    %240 = vmatpush2.msra.mxu0 0.0
    %241 = vmatprep.subr.mxu0 0.0
    %242 = vmatpush2.msra.mxu0 0.0
    %243 = vmatprep.subr.mxu0 0.0
    %244 = vmatpush2.msra.mxu0 0.0
    %245 = vmatprep.subr.mxu0 0.0
    %246 = vmatpush2.msra.mxu0 0.0
    %247 = vmatprep.subr.mxu0 0.0
    %248 = vmatpush2.msra.mxu0 0.0
    %249 = vmatprep.subr.mxu0 0.0
    %250 = vmatpush2.msra.mxu0 0.0
    %251 = vmatprep.subr.mxu0 0.0
    %252 = vmatpush2.msra.mxu0 0.0
    %253 = vmatprep.subr.mxu0 0.0
    %254 = vmatpush2.msra.mxu0 0.0
    %255 = vmatprep.subr.mxu0 0.0
    %256 = vmatpush2.msra.mxu0 0.0
    %257 = vmatprep.subr.mxu0 0.0
    %258 = vmatpush2.msra.mxu0 0.0
    %259 = vmatprep.subr.mxu0 0.0
    %260 = vmatpush2.msra.mxu0 0.0
    %261 = vmatprep.subr.mxu0 0.0
    %262 = vmatpush2.msra.mxu0 0.0
    %263 = vmatprep.subr.mxu0 0.0
    %264 = vmatpush2.msra.mxu0 0.0
    %265 = vmatprep.subr.mxu0 0.0
    %266 = vmatpush2.msra.mxu0 0.0
    %267 = vmatprep.mubr.f32.mxu0 0.0
    %268 = vmatmul.mubr.f32.gmra.mxu0 %v194
    %v269 = vpop.f32.mrf.mxu0
    %v270 = vadd.f32 0.0, %v269
    %v271 = vpop.f32.mrf.mxu0
    %272 = vmatprep.mubr.f32.mxu0 0.0
    %273 = vmatmul.mubr.f32.gmra.mxu0 %v197
    %v274 = vpop.f32.mrf.mxu0
    %v275 = vadd.f32 0.0, %v274
    %v276 = vpop.f32.mrf.mxu0
    %277 = vdwg.mxu0
    %v279 = vsel %vm100, %v182, 0
    %v282 = vsel %vm100, %v183, 0
    %284 = vmatprep.subr.mxu0 0.0
    %285 = vmatpush1.msra.mxu0 0.0
    %286 = vmatprep.subr.mxu0 0.0
    %287 = vmatpush1.msra.mxu0 0.0
    %288 = vmatprep.subr.mxu0 0.0
    %289 = vmatpush1.msra.mxu0 0.0
    %290 = vmatprep.subr.mxu0 0.0
    %291 = vmatpush1.msra.mxu0 0.0
    %292 = vmatprep.subr.mxu0 0.0
    %293 = vmatpush1.msra.mxu0 0.0
    %294 = vmatprep.subr.mxu0 0.0
    %295 = vmatpush1.msra.mxu0 0.0
    %296 = vmatprep.subr.mxu0 0.0
    %297 = vmatpush1.msra.mxu0 0.0
    %298 = vmatprep.subr.mxu0 0.0
    %299 = vmatpush1.msra.mxu0 0.0
    %300 = vmatprep.subr.mxu0 0.0
    %301 = vmatpush1.msra.mxu0 0.0
    %302 = vmatprep.subr.mxu0 0.0
    %303 = vmatpush1.msra.mxu0 0.0
    %304 = vmatprep.subr.mxu0 0.0
    %305 = vmatpush1.msra.mxu0 0.0
    %306 = vmatprep.subr.mxu0 0.0
    %307 = vmatpush1.msra.mxu0 0.0
    %308 = vmatprep.subr.mxu0 0.0
    %309 = vmatpush1.msra.mxu0 %v187
    %310 = vmatprep.subr.mxu0 0.0
    %311 = vmatpush1.msra.mxu0 %v186
    %312 = vmatprep.subr.mxu0 0.0
    %313 = vmatpush1.msra.mxu0 %v185
    %314 = vmatprep.subr.mxu0 0.0
    %315 = vmatpush1.msra.mxu0 %v184
    %316 = vmatprep.subr.mxu0 0.0
    %317 = vmatpush2.msra.mxu0 0.0
    %318 = vmatprep.subr.mxu0 0.0
    %319 = vmatpush2.msra.mxu0 0.0
    %320 = vmatprep.subr.mxu0 0.0
    %321 = vmatpush2.msra.mxu0 0.0
    %322 = vmatprep.subr.mxu0 0.0
    %323 = vmatpush2.msra.mxu0 0.0
    %324 = vmatprep.subr.mxu0 0.0
    %325 = vmatpush2.msra.mxu0 0.0
    %326 = vmatprep.subr.mxu0 0.0
    %327 = vmatpush2.msra.mxu0 0.0
    %328 = vmatprep.subr.mxu0 0.0
    %329 = vmatpush2.msra.mxu0 0.0
    %330 = vmatprep.subr.mxu0 0.0
    %331 = vmatpush2.msra.mxu0 0.0
    %332 = vmatprep.subr.mxu0 0.0
    %333 = vmatpush2.msra.mxu0 0.0
    %334 = vmatprep.subr.mxu0 0.0
    %335 = vmatpush2.msra.mxu0 0.0
    %336 = vmatprep.subr.mxu0 0.0
    %337 = vmatpush2.msra.mxu0 0.0
    %338 = vmatprep.subr.mxu0 0.0
    %339 = vmatpush2.msra.mxu0 0.0
    %340 = vmatprep.subr.mxu0 0.0
    %341 = vmatpush2.msra.mxu0 0.0
    %342 = vmatprep.subr.mxu0 0.0
    %343 = vmatpush2.msra.mxu0 0.0
    %344 = vmatprep.subr.mxu0 0.0
    %345 = vmatpush2.msra.mxu0 0.0
    %346 = vmatprep.subr.mxu0 0.0
    %347 = vmatpush2.msra.mxu0 0.0
    %348 = vmatprep.mubr.f32.mxu0 0.0
    %349 = vmatmul.mubr.f32.gmra.mxu0 %v279
    %v350 = vpop.f32.mrf.mxu0
    %v351 = vadd.f32 %v270, %v350
    %v352 = vpop.f32.mrf.mxu0
    %353 = vmatprep.mubr.f32.mxu0 0.0
    %354 = vmatmul.mubr.f32.gmra.mxu0 %v282
    %v355 = vpop.f32.mrf.mxu0
    %v356 = vadd.f32 %v275, %v355
    %v357 = vpop.f32.mrf.mxu0
    %358 = vdwg.mxu0
    %v359 = vld [vmem:[%s6] sm:$0x1]
    %v361 = vlaneseq
    %v362 = vshrl.u32 %v361, 7
    %v363 = vsub.s32 0, %v362
    %v364 = vrot.slane %v359, %v363
    %v366 = vadd.f32 %v351, %v364
    %v367 = vadd.f32 %v356, %v364
    %v368 = vmax.f32 %v366, 0.0
    %v369 = vmax.f32 %v367, 0.0
    %v370 = vld [vmem:[%s7] sm:$0xff]
    %v371 = vld [vmem:[%s7 + $0x8] sm:$0xff]
    %v372 = vld [vmem:[%s7 + $0x10] sm:$0xff]
    %v373 = vld [vmem:[%s7 + $0x18] sm:$0xff]
    %v374 = vld [vmem:[%s8] sm:$0x1]
    %v376 = vlaneseq
    %v377 = vshrl.u32 %v376, 7
    %v378 = vsub.s32 0, %v377
    %v379 = vrot.slane %v374, %v378
    %v382 = vsel %vm100, %v368, 0
    %v385 = vsel %vm100, %v369, 0
    %387 = vmatprep.subr.mxu0 0.0
    %388 = vmatpush1.msra.mxu0 0.0
    %389 = vmatprep.subr.mxu0 0.0
    %390 = vmatpush1.msra.mxu0 0.0
    %391 = vmatprep.subr.mxu0 0.0
    %392 = vmatpush1.msra.mxu0 0.0
    %393 = vmatprep.subr.mxu0 0.0
    %394 = vmatpush1.msra.mxu0 0.0
    %395 = vmatprep.subr.mxu0 0.0
    %396 = vmatpush1.msra.mxu0 0.0
    %397 = vmatprep.subr.mxu0 0.0
    %398 = vmatpush1.msra.mxu0 0.0
    %399 = vmatprep.subr.mxu0 0.0
    %400 = vmatpush1.msra.mxu0 0.0
    %401 = vmatprep.subr.mxu0 0.0
    %402 = vmatpush1.msra.mxu0 0.0
    %403 = vmatprep.subr.mxu0 0.0
    %404 = vmatpush1.msra.mxu0 0.0
    %405 = vmatprep.subr.mxu0 0.0
    %406 = vmatpush1.msra.mxu0 0.0
    %407 = vmatprep.subr.mxu0 0.0
    %408 = vmatpush1.msra.mxu0 0.0
    %409 = vmatprep.subr.mxu0 0.0
    %410 = vmatpush1.msra.mxu0 0.0
    %411 = vmatprep.subr.mxu0 0.0
    %412 = vmatpush1.msra.mxu0 %v373
    %413 = vmatprep.subr.mxu0 0.0
    %414 = vmatpush1.msra.mxu0 %v372
    %415 = vmatprep.subr.mxu0 0.0
    %416 = vmatpush1.msra.mxu0 %v371
    %417 = vmatprep.subr.mxu0 0.0
    %418 = vmatpush1.msra.mxu0 %v370
    %419 = vmatprep.subr.mxu0 0.0
    %420 = vmatpush2.msra.mxu0 0.0
    %421 = vmatprep.subr.mxu0 0.0
    %422 = vmatpush2.msra.mxu0 0.0
    %423 = vmatprep.subr.mxu0 0.0
    %424 = vmatpush2.msra.mxu0 0.0
    %425 = vmatprep.subr.mxu0 0.0
    %426 = vmatpush2.msra.mxu0 0.0
    %427 = vmatprep.subr.mxu0 0.0
    %428 = vmatpush2.msra.mxu0 0.0
    %429 = vmatprep.subr.mxu0 0.0
    %430 = vmatpush2.msra.mxu0 0.0
    %431 = vmatprep.subr.mxu0 0.0
    %432 = vmatpush2.msra.mxu0 0.0
    %433 = vmatprep.subr.mxu0 0.0
    %434 = vmatpush2.msra.mxu0 0.0
    %435 = vmatprep.subr.mxu0 0.0
    %436 = vmatpush2.msra.mxu0 0.0
    %437 = vmatprep.subr.mxu0 0.0
    %438 = vmatpush2.msra.mxu0 0.0
    %439 = vmatprep.subr.mxu0 0.0
    %440 = vmatpush2.msra.mxu0 0.0
    %441 = vmatprep.subr.mxu0 0.0
    %442 = vmatpush2.msra.mxu0 0.0
    %443 = vmatprep.subr.mxu0 0.0
    %444 = vmatpush2.msra.mxu0 0.0
    %445 = vmatprep.subr.mxu0 0.0
    %446 = vmatpush2.msra.mxu0 0.0
    %447 = vmatprep.subr.mxu0 0.0
    %448 = vmatpush2.msra.mxu0 0.0
    %449 = vmatprep.subr.mxu0 0.0
    %450 = vmatpush2.msra.mxu0 0.0
    %451 = vmatprep.mubr.f32.mxu0 0.0
    %452 = vmatmul.mubr.f32.gmra.mxu0 %v382
    %v453 = vpop.f32.mrf.mxu0
    %v454 = vadd.f32 %v379, %v453
    %v455 = vpop.f32.mrf.mxu0
    %456 = vmatprep.mubr.f32.mxu0 0.0
    %457 = vmatmul.mubr.f32.gmra.mxu0 %v385
    %v458 = vpop.f32.mrf.mxu0
    %v459 = vadd.f32 %v379, %v458
    %v460 = vpop.f32.mrf.mxu0
    %461 = vdwg.mxu0
    %v462 = vxor.u32 %v454, 2147483648
    %v463 = vxor.u32 %v459, 2147483648
    %v464 = vmul.f32 %v462, 1.442695
    %v465 = vpow.pop %v464
    %v466 = vmul.f32 %v463, 1.442695
    %v467 = vpow.pop %v466
    %v468 = vadd.f32 %v465, 1.0
    %v469 = vadd.f32 %v467, 1.0
    %v470 = vrcp.pop %v468
    %v471 = vmul.f32 1.0, %v470
    %v472 = vrcp.pop %v469
    %v473 = vmul.f32 1.0, %v472
    %vm474 = vcmask 31744
    %475 = vst.msk [vmem:[%s9] sm:$0xff] %vm474, %v471
    %476 = vst.msk [vmem:[%s9 + $0x8] sm:$0xff] %vm474, %v473
    // Predicated region
    $region54: #{tpu_custom_call.1} parent=1 // pred_check
      _
    $region55: #{tpu_custom_call.1} parent=1 // pred_check_branch
      %478 = sbr.rel (0) target = $region57
    $region56: #{tpu_custom_call.1} parent=1 // pred_region
      _
    $region57: #{tpu_custom_call.1} parent=1 // pred_fallthru
      _
    // Predicated region
    $region58: #{tpu_custom_call.1} parent=1 // pred_check
      _
    $region59: #{tpu_custom_call.1} parent=1 // pred_check_branch
      %480 = sbr.rel (0) target = $region61
    $region60: #{tpu_custom_call.1} parent=1 // pred_region
      _
    $region61: #{tpu_custom_call.1} parent=1 // pred_fallthru
      _
    %481 = vsyncpa [#allocation3], 1
    %482 = vsyncpa [#allocation5], 1
    %483 = vsyncpa [#allocation8], 1

</llo_original>
